<compile_context>
chip_gen: v7x
topology: tpu7x:2x2x1
jax: 0.10.0
libtpu: 0.0.40
codegen_flags: <defaults>
</compile_context>

<pallas_src>
import functools
import math

import jax
import jax.numpy as jnp
from jax import lax
from jax.experimental import pallas as pl
from jax.experimental.pallas import tpu as pltpu


# ----------------------------- Pallas kernel --------------------------------
def _embed_pe_kernel(tok_ref, emb_ref, pe_ref, out_ref, *, batch, vocab, ts):
    # tok_ref: (T, 1)  int32 token ids for this tile (T = ts * batch).
    # emb_ref: (V, D)  embedding table, VMEM-resident across the grid.
    # pe_ref : (TS, D) positional-encoding rows for this tile's positions.
    # out_ref: (T, D)  dense output tile (position-major rows: row = s*B + b).
    t = out_ref.shape[0]

    # --- token gather as a one-hot MXU matmul: (T, V) @ (V, D) -> (T, D) ---
    tok = tok_ref[...]                                                   # (T, 1) int32
    vocab_iota = lax.broadcasted_iota(jnp.int32, (t, vocab), 1)          # (T, V)
    onehot_tok = (tok == vocab_iota).astype(emb_ref.dtype)               # (T, V)
    acc = jnp.dot(onehot_tok, emb_ref[...],
                  preferred_element_type=jnp.float32)                    # (T, D) f32

    # --- broadcast PE across batch via a second one-hot matmul ---
    # Row j of the tile corresponds to local sequence position j // batch.
    # Expressed as a range compare (col*B <= row < col*B + B) so no integer
    # division is needed on the VPU.
    row = lax.broadcasted_iota(jnp.int32, (t, ts), 0)                    # (T, TS)
    col_b = lax.broadcasted_iota(jnp.int32, (t, ts), 1) * batch          # (T, TS)
    onehot_pos = ((row >= col_b) & (row < col_b + batch)).astype(pe_ref.dtype)
    acc = acc + jnp.dot(onehot_pos, pe_ref[...],
                        preferred_element_type=jnp.float32)              # (T, D) f32

    out_ref[...] = acc.astype(out_ref.dtype)


# ------------------------------- wrapper -------------------------------------
def _pick_seq_tile(S, B):
    """Largest sequence-tile TS (multiple of 8, <=128) with TS*B <= ~1024."""
    cap = max(8, min(128, (1024 // max(B, 1)) // 8 * 8))
    if S <= cap:
        return S          # single tile, full extent (always a legal block)
    return cap


def sketch_embedding_pallas(sketch_tokens, emb_table, pe_table):
    """sketch_tokens: (B, S, 1) integer tokens.
    emb_table: (vocab_size, d_model) float32.
    pe_table : (max_len, d_model) float32 sinusoidal PE.
    returns  : (S, B, d_model) float32  (same as the PyTorch forward)."""
    B, S, _ = sketch_tokens.shape
    V, D = emb_table.shape
    assert S <= pe_table.shape[0], "sequence length exceeds positional-encoding table"

    TS = _pick_seq_tile(S, B)
    S_pad = ((S + TS - 1) // TS) * TS
    num_tiles = S_pad // TS
    T = TS * B

    # (B, S, 1) -> position-major flattened (S_pad*B, 1) token table, matching
    # the row order of the (S, B, D) output.
    tok = sketch_tokens.reshape(B, S).astype(jnp.int32).T                # (S, B)
    if S_pad != S:
        tok = jnp.pad(tok, ((0, S_pad - S), (0, 0)))                     # pad with id 0
    tok = tok.reshape(S_pad * B, 1)

    pe = pe_table[:S].astype(emb_table.dtype)                            # (S, D)
    if S_pad != S:
        pe = jnp.pad(pe, ((0, S_pad - S), (0, 0)))                       # (S_pad, D)

    kernel = functools.partial(_embed_pe_kernel, batch=B, vocab=V, ts=TS)

    out_flat = pl.pallas_call(
        kernel,
        out_shape=jax.ShapeDtypeStruct((S_pad * B, D), emb_table.dtype),
        grid_spec=pltpu.PrefetchScalarGridSpec(
            num_scalar_prefetch=0,
            grid=(num_tiles,),
            in_specs=[
                # Token ids for this tile: (T, 1) block of the flattened table.
                pl.BlockSpec((T, 1), lambda i: (i, 0)),
                # Embedding table: full array, resident in VMEM across the grid.
                pl.BlockSpec((V, D), lambda i: (0, 0)),
                # PE rows covering this tile's TS sequence positions.
                pl.BlockSpec((TS, D), lambda i: (i, 0)),
            ],
            out_specs=pl.BlockSpec((T, D), lambda i: (i, 0)),
        ),
        compiler_params=pltpu.CompilerParams(
            dimension_semantics=("parallel",),
        ),
    )(tok, emb_table, pe)

    out_flat = out_flat[: S * B]
    return out_flat.reshape(S, B, D)


# ------------------------- parameter construction ---------------------------
def make_positional_encoding(d_model, max_len=5000):
    """Exactly mirrors the PyTorch PositionalEncoding buffer (before unsqueeze)."""
    position = jnp.arange(0, max_len, dtype=jnp.float32)[:, None]          # (max_len, 1)
    div_term = jnp.exp(
        jnp.arange(0, d_model, 2, dtype=jnp.float32) * (-math.log(10000.0) / d_model)
    )                                                                       # (d_model//2,)
    angles = position * div_term                                            # (max_len, d_model//2)
    pe = jnp.zeros((max_len, d_model), dtype=jnp.float32)
    pe = pe.at[:, 0::2].set(jnp.sin(angles))
    pe = pe.at[:, 1::2].set(jnp.cos(angles))
    return pe


# ------------------------------- reference ----------------------------------
def sketch_embedding_ref(sketch_tokens, emb_table, pe_table):
    B, S, _ = sketch_tokens.shape
    tok = sketch_tokens.reshape(B, S).astype(jnp.int32)
    emb = jnp.take(emb_table, tok, axis=0)          # (B, S, d_model)
    emb = jnp.transpose(emb, (1, 0, 2))             # (S, B, d_model)
    return emb + pe_table[:S][:, None, :]


# --------------------------------- main --------------------------------------
if __name__ == "__main__":
    vocab_size = 64
    d_model = 128
    batch = 2
    seq = 8

    key = jax.random.PRNGKey(0)
    k_emb, k_tok = jax.random.split(key)

    # nn.Embedding default init: N(0, 1).
    emb_table = jax.random.normal(k_emb, (vocab_size, d_model), dtype=jnp.float32)
    pe_table = make_positional_encoding(d_model, max_len=5000)

    # Input tokens shaped (batch, seq, 1), as implied by the squeeze(2) in forward.
    sketch_tokens = jax.random.randint(k_tok, (batch, seq, 1), 0, vocab_size, dtype=jnp.int32)

    out = sketch_embedding_pallas(sketch_tokens, emb_table, pe_table)
    out = jax.block_until_ready(out)

    ref = sketch_embedding_ref(sketch_tokens, emb_table, pe_table)
    assert out.shape == (seq, batch, d_model), out.shape
    assert jnp.allclose(out, ref, atol=1e-5, rtol=1e-5), "mismatch vs reference"

    print("KERNEL_OK")
</pallas_src>

<mosaic_0001>
module attributes {stable_mosaic.version = 11 : i64} {
  func.func @_embed_pe_kernel(%arg0: i32, %arg1: memref<16x1xi32, #tpu.memory_space<vmem>>, %arg2: memref<64x128xf32, #tpu.memory_space<vmem>>, %arg3: memref<8x128xf32, #tpu.memory_space<vmem>>, %arg4: memref<16x128xf32, #tpu.memory_space<vmem>>) attributes {dimension_semantics = [#tpu.dimension_semantics<parallel>], iteration_bounds = array<i64: 1>, scalar_prefetch = 0 : i64, scratch_operands = 0 : i64, tpu.core_type = #tpu.core_type<tc>, window_params = [{transform_indices = @transform_0, window_bounds = array<i64: 16, 1>}, {pipeline_mode = #tpu.pipeline_mode<synchronous>, transform_indices = @transform_1, window_bounds = array<i64: 64, 128>}, {transform_indices = @transform_2, window_bounds = array<i64: 8, 128>}, {transform_indices = @transform_3, window_bounds = array<i64: 16, 128>}]} {
    %c0 = arith.constant 0 : index
    %c0_0 = arith.constant 0 : index
    %0 = vector.load %arg1[%c0, %c0_0] : memref<16x1xi32, #tpu.memory_space<vmem>>, vector<16x1xi32>
    %1 = tpu.iota {dimensions = array<i32: 1>} : vector<16x64xi32>
    %2 = vector.broadcast %0 : vector<16x1xi32> to vector<16x64xi32>
    %3 = arith.cmpi eq, %2, %1 : vector<16x64xi32>
    %4 = arith.extui %3 : vector<16x64xi1> to vector<16x64xi32>
    %5 = arith.sitofp %4 : vector<16x64xi32> to vector<16x64xf32>
    %c0_1 = arith.constant 0 : index
    %c0_2 = arith.constant 0 : index
    %6 = vector.load %arg2[%c0_1, %c0_2] : memref<64x128xf32, #tpu.memory_space<vmem>>, vector<64x128xf32>
    %cst = arith.constant dense<0.000000e+00> : vector<16x128xf32>
    %7 = tpu.matmul %5, %6, %cst {dimension_numbers = #tpu.dot_dimension_numbers<[1], [0], [0], [1], [0, 0, 1, 1], [], []>} : vector<16x64xf32>, vector<64x128xf32>, vector<16x128xf32> -> vector<16x128xf32>
    %8 = tpu.iota {dimensions = array<i32: 0>} : vector<16x8xi32>
    %9 = tpu.iota {dimensions = array<i32: 1>} : vector<16x8xi32>
    %c2_i32 = arith.constant 2 : i32
    %10 = vector.broadcast %c2_i32 : i32 to vector<16x8xi32>
    %11 = arith.muli %9, %10 : vector<16x8xi32>
    %12 = arith.cmpi sge, %8, %11 : vector<16x8xi32>
    %c2_i32_3 = arith.constant 2 : i32
    %13 = vector.broadcast %c2_i32_3 : i32 to vector<16x8xi32>
    %14 = arith.addi %11, %13 : vector<16x8xi32>
    %15 = arith.cmpi slt, %8, %14 : vector<16x8xi32>
    %16 = arith.andi %12, %15 : vector<16x8xi1>
    %17 = arith.extui %16 : vector<16x8xi1> to vector<16x8xi32>
    %18 = arith.sitofp %17 : vector<16x8xi32> to vector<16x8xf32>
    %c0_4 = arith.constant 0 : index
    %c0_5 = arith.constant 0 : index
    %19 = vector.load %arg3[%c0_4, %c0_5] : memref<8x128xf32, #tpu.memory_space<vmem>>, vector<8x128xf32>
    %cst_6 = arith.constant dense<0.000000e+00> : vector<16x128xf32>
    %20 = tpu.matmul %18, %19, %cst_6 {dimension_numbers = #tpu.dot_dimension_numbers<[1], [0], [0], [1], [0, 0, 1, 1], [], []>} : vector<16x8xf32>, vector<8x128xf32>, vector<16x128xf32> -> vector<16x128xf32>
    %21 = arith.addf %7, %20 : vector<16x128xf32>
    %c0_7 = arith.constant 0 : index
    %c0_8 = arith.constant 0 : index
    %22 = vector.load %arg4[%c0_7, %c0_8] : memref<16x128xf32, #tpu.memory_space<vmem>>, vector<16x128xf32>
    tpu.vector_store %arg4[%c0_7, %c0_8], %21 {strides = array<i32>} : memref<16x128xf32, #tpu.memory_space<vmem>>, vector<16x128xf32>,
    return
  }
  func.func @transform_0(%arg0: i32) -> (i32, i32) {
    %c0_i32 = arith.constant 0 : i32
    %c0_i32_0 = arith.constant 0 : i32
    return %arg0, %c0_i32 : i32, i32
  }
  func.func @transform_1(%arg0: i32) -> (i32, i32) {
    %c0_i32 = arith.constant 0 : i32
    %c0_i32_0 = arith.constant 0 : i32
    %c0_i32_1 = arith.constant 0 : i32
    return %c0_i32, %c0_i32_0 : i32, i32
  }
  func.func @transform_2(%arg0: i32) -> (i32, i32) {
    %c0_i32 = arith.constant 0 : i32
    %c0_i32_0 = arith.constant 0 : i32
    return %arg0, %c0_i32 : i32, i32
  }
  func.func @transform_3(%arg0: i32) -> (i32, i32) {
    %c0_i32 = arith.constant 0 : i32
    %c0_i32_0 = arith.constant 0 : i32
    return %arg0, %c0_i32 : i32, i32
  }
}

</mosaic_0001>

<llo_original>
// kernel: tpu_custom_call.1
$region0: #{tpu_custom_call.1}
  #allocation0 [shape = 'u32[]', space=smem, size = 0x4, offset = 0x4, fixed_abs, tag = 'smem constant byte address 0x4 - core index']
  #allocation1 [shape = 'u32[144,128]{1,0:T(1,128)}', space=vmem, size = 0x12000, scoped, tag = 'internal scratch']
  %s0 = inlined_call_operand.vmem [shape: s32[16,1], index: 0, kind: input, shape index: {}]
  %s1 = inlined_call_operand.hbm [shape: f32[64,128], index: 1, kind: input, shape index: {}]
  %s2 = inlined_call_operand.vmem [shape: f32[8,128], index: 2, kind: input, shape index: {}]
  %s3 = inlined_call_operand.hbm [shape: f32[16,128], index: 3, kind: output, shape index: {}]
  %s4 = sld [smem:[#allocation0]]
  $region26: #{tpu_custom_call.1} parent=0
    _
  %s6 = ssub.s32 1, %s4
  %s7 = scalar_select 0, %s6, %s4
  $region1: #{tpu_custom_call.1} parent=0
    #allocation2 [shape = 'u8[32768]{0}', space=vmem, size = 0x8000, scoped, tag = 'input window, operand 1, single buffered']
    #allocation3 [shape = 's32[1]{0}', space=sflag, size = 0x4, scoped, tag = 'scoped memory for tpu_custom_call.1']
    #allocation4 [shape = 's32[1]{0}', space=sflag, size = 0x4, scoped, tag = 'scoped memory for tpu_custom_call.1']
    #allocation5 [shape = 'u8[8192]{0}', space=vmem, size = 0x2000, scoped, tag = 'output window, operand 0, single buffered']
    %8 = vsyncpa [#allocation3], 0
    %9 = vsyncpa [#allocation4], 0
    // Predicated region
    $region2: #{tpu_custom_call.1} parent=1 // pred_check
      _
    $region3: #{tpu_custom_call.1} parent=1 // pred_check_branch
      %11 = sbr.rel (0) target = $region5
    $region4: #{tpu_custom_call.1} parent=1 // pred_region
      _
    $region5: #{tpu_custom_call.1} parent=1 // pred_fallthru
      _
    // Predicated region
    $region6: #{tpu_custom_call.1} parent=1 // pred_check
      _
    $region7: #{tpu_custom_call.1} parent=1 // pred_check_branch
      %13 = sbr.rel (0) target = $region9
    $region8: #{tpu_custom_call.1} parent=1 // pred_region
      %s15 = ssub.s32 1024, 1024
      %16 = vsyncadd [#allocation3], %s15
      %s17 = sshll.u32 [#allocation2], 4
      %s18 = int_to_ptr.vmem [resolvable:$true] %s17
      %23 = dma.hbm_to_vmem [thread:$0]  %s1, 1024, %s18, [#allocation3], 128, 128, 8
    $region9: #{tpu_custom_call.1} parent=1 // pred_fallthru
      _
    // Predicated region
    $region10: #{tpu_custom_call.1} parent=1 // pred_check
      _
    $region11: #{tpu_custom_call.1} parent=1 // pred_check_branch
      %25 = sbr.rel (0) target = $region13
    $region12: #{tpu_custom_call.1} parent=1 // pred_region
      _
    $region13: #{tpu_custom_call.1} parent=1 // pred_fallthru
      _
    // Predicated region
    $region14: #{tpu_custom_call.1} parent=1 // pred_check
      _
    $region15: #{tpu_custom_call.1} parent=1 // pred_check_branch
      %27 = sbr.rel (0) target = $region17
    $region16: #{tpu_custom_call.1} parent=1 // pred_region
      %28 = dma.done [#allocation3], 1024
    $region17: #{tpu_custom_call.1} parent=1 // pred_fallthru
      _
    %v29 = vld [vmem:[%s0] sm:$0xff]
    %v30 = vld [vmem:[%s0 + $0x8] sm:$0xff]
    %v31 = vlaneseq
    %v32 = vand.u32 %v31, 127
    %33 = vset.pattern.permute.xlu0 0
    %34 = vperm.xlu0 %33, %v29
    %v35 = vpop.permute.xlu0 %34
    %36 = vset.pattern.permute.xlu0 0
    %37 = vperm.xlu0 %36, %v30
    %v38 = vpop.permute.xlu0 %37
    %vm39 = vcmp.eq.s32.totalorder %v35, %v32
    %vm40 = vcmp.eq.s32.totalorder %v38, %v32
    %v41 = vsel %vm39, 1, 0
    %v42 = vsel %vm40, 1, 0
    %v43 = vcvt.s32.f32 %v41
    %v44 = vcvt.s32.f32 %v42
    %v45 = vld [vmem:[#allocation2] sm:$0xff]
    %v46 = vld [vmem:[#allocation2 + $0x8] sm:$0xff]
    %v47 = vld [vmem:[#allocation2 + $0x10] sm:$0xff]
    %v48 = vld [vmem:[#allocation2 + $0x18] sm:$0xff]
    %v49 = vld [vmem:[#allocation2 + $0x20] sm:$0xff]
    %v50 = vld [vmem:[#allocation2 + $0x28] sm:$0xff]
    %v51 = vld [vmem:[#allocation2 + $0x30] sm:$0xff]
    %v52 = vld [vmem:[#allocation2 + $0x38] sm:$0xff]
    %v53 = vlaneseq
    %v54 = vshrl.u32 %v53, 7
    %v55 = vadd.s32 %v54, 8
    %v56 = vmul.u32 %v32, 2
    %vm57 = vcmp.ge.s32.totalorder %v54, %v56
    %vm58 = vcmp.ge.s32.totalorder %v55, %v56
    %v59 = vadd.s32 %v56, 2
    %vm60 = vcmp.lt.s32.totalorder %v54, %v59
    %vm61 = vcmp.lt.s32.totalorder %v55, %v59
    %vm62 = vmand %vm57, %vm60
    %vm63 = vmand %vm58, %vm61
    %v64 = vsel %vm62, 1, 0
    %v65 = vsel %vm63, 1, 0
    %v66 = vcvt.s32.f32 %v64
    %v67 = vcvt.s32.f32 %v65
    %v68 = vld [vmem:[%s2] sm:$0xff]
    %vm69 = vcmask 64512
    %v71 = vsel %vm69, %v66, 0
    %v74 = vsel %vm69, %v67, 0
    %76 = vmatprep.subr.mxu0 0.0
    %77 = vmatpush1.msra.mxu0 %v68
    %78 = vmatprep.subr.mxu0 0.0
    %79 = vmatpush1.msra.mxu0 0.0
    %80 = vmatprep.subr.mxu0 0.0
    %81 = vmatpush1.msra.mxu0 0.0
    %82 = vmatprep.subr.mxu0 0.0
    %83 = vmatpush1.msra.mxu0 0.0
    %84 = vmatprep.subr.mxu0 0.0
    %85 = vmatpush1.msra.mxu0 0.0
    %86 = vmatprep.subr.mxu0 0.0
    %87 = vmatpush1.msra.mxu0 0.0
    %88 = vmatprep.subr.mxu0 0.0
    %89 = vmatpush1.msra.mxu0 0.0
    %90 = vmatprep.subr.mxu0 0.0
    %91 = vmatpush1.msra.mxu0 0.0
    %92 = vmatprep.subr.mxu0 0.0
    %93 = vmatpush1.msra.mxu0 0.0
    %94 = vmatprep.subr.mxu0 0.0
    %95 = vmatpush1.msra.mxu0 0.0
    %96 = vmatprep.subr.mxu0 0.0
    %97 = vmatpush1.msra.mxu0 0.0
    %98 = vmatprep.subr.mxu0 0.0
    %99 = vmatpush1.msra.mxu0 0.0
    %100 = vmatprep.subr.mxu0 0.0
    %101 = vmatpush1.msra.mxu0 0.0
    %102 = vmatprep.subr.mxu0 0.0
    %103 = vmatpush1.msra.mxu0 0.0
    %104 = vmatprep.subr.mxu0 0.0
    %105 = vmatpush1.msra.mxu0 0.0
    %106 = vmatprep.subr.mxu0 0.0
    %107 = vmatpush1.msra.mxu0 0.0
    %108 = vmatprep.subr.mxu0 0.0
    %109 = vmatpush1.msra.mxu0 0.0
    %110 = vmatprep.subr.mxu0 0.0
    %111 = vmatpush1.msra.mxu0 0.0
    %112 = vmatprep.subr.mxu0 0.0
    %113 = vmatpush1.msra.mxu0 0.0
    %114 = vmatprep.subr.mxu0 0.0
    %115 = vmatpush1.msra.mxu0 0.0
    %116 = vmatprep.subr.mxu0 0.0
    %117 = vmatpush1.msra.mxu0 0.0
    %118 = vmatprep.subr.mxu0 0.0
    %119 = vmatpush1.msra.mxu0 0.0
    %120 = vmatprep.subr.mxu0 0.0
    %121 = vmatpush1.msra.mxu0 0.0
    %122 = vmatprep.subr.mxu0 0.0
    %123 = vmatpush1.msra.mxu0 0.0
    %124 = vmatprep.subr.mxu0 0.0
    %125 = vmatpush1.msra.mxu0 0.0
    %126 = vmatprep.subr.mxu0 0.0
    %127 = vmatpush1.msra.mxu0 0.0
    %128 = vmatprep.subr.mxu0 0.0
    %129 = vmatpush1.msra.mxu0 0.0
    %130 = vmatprep.subr.mxu0 0.0
    %131 = vmatpush1.msra.mxu0 0.0
    %132 = vmatprep.subr.mxu0 0.0
    %133 = vmatpush1.msra.mxu0 0.0
    %134 = vmatprep.subr.mxu0 0.0
    %135 = vmatpush1.msra.mxu0 0.0
    %136 = vmatprep.subr.mxu0 0.0
    %137 = vmatpush1.msra.mxu0 0.0
    %138 = vmatprep.subr.mxu0 0.0
    %139 = vmatpush1.msra.mxu0 0.0
    %140 = vmatprep.mubr.f32.mxu0 0.0
    %141 = vmatmul.mubr.f32.gmra.mrb[0].mxu0 %v71
    %v142 = vpop.f32.mrb[0].mxu0
    %v143 = vadd.f32 0.0, %v142
    %v144 = vpop.f32.mrb[0].mxu0
    %145 = vmatprep.mubr.f32.mxu0 0.0
    %146 = vmatmul.mubr.f32.gmra.mrb[0].mxu0 %v74
    %v147 = vpop.f32.mrb[0].mxu0
    %v148 = vadd.f32 0.0, %v147
    %v149 = vpop.f32.mrb[0].mxu0
    %150 = vdwg.mxu0
    %vm151 = vcmask 523264
    %v153 = vsel %vm151, %v43, 0
    %v156 = vsel %vm151, %v44, 0
    %158 = vmatprep.subr.mxu0 0.0
    %159 = vmatpush1.msra.mxu0 %v45
    %160 = vmatprep.subr.mxu0 0.0
    %161 = vmatpush1.msra.mxu0 %v46
    %162 = vmatprep.subr.mxu0 0.0
    %163 = vmatpush1.msra.mxu0 %v47
    %164 = vmatprep.subr.mxu0 0.0
    %165 = vmatpush1.msra.mxu0 %v48
    %166 = vmatprep.subr.mxu0 0.0
    %167 = vmatpush1.msra.mxu0 %v49
    %168 = vmatprep.subr.mxu0 0.0
    %169 = vmatpush1.msra.mxu0 %v50
    %170 = vmatprep.subr.mxu0 0.0
    %171 = vmatpush1.msra.mxu0 %v51
    %172 = vmatprep.subr.mxu0 0.0
    %173 = vmatpush1.msra.mxu0 %v52
    %174 = vmatprep.subr.mxu0 0.0
    %175 = vmatpush1.msra.mxu0 0.0
    %176 = vmatprep.subr.mxu0 0.0
    %177 = vmatpush1.msra.mxu0 0.0
    %178 = vmatprep.subr.mxu0 0.0
    %179 = vmatpush1.msra.mxu0 0.0
    %180 = vmatprep.subr.mxu0 0.0
    %181 = vmatpush1.msra.mxu0 0.0
    %182 = vmatprep.subr.mxu0 0.0
    %183 = vmatpush1.msra.mxu0 0.0
    %184 = vmatprep.subr.mxu0 0.0
    %185 = vmatpush1.msra.mxu0 0.0
    %186 = vmatprep.subr.mxu0 0.0
    %187 = vmatpush1.msra.mxu0 0.0
    %188 = vmatprep.subr.mxu0 0.0
    %189 = vmatpush1.msra.mxu0 0.0
    %190 = vmatprep.subr.mxu0 0.0
    %191 = vmatpush1.msra.mxu0 0.0
    %192 = vmatprep.subr.mxu0 0.0
    %193 = vmatpush1.msra.mxu0 0.0
    %194 = vmatprep.subr.mxu0 0.0
    %195 = vmatpush1.msra.mxu0 0.0
    %196 = vmatprep.subr.mxu0 0.0
    %197 = vmatpush1.msra.mxu0 0.0
    %198 = vmatprep.subr.mxu0 0.0
    %199 = vmatpush1.msra.mxu0 0.0
    %200 = vmatprep.subr.mxu0 0.0
    %201 = vmatpush1.msra.mxu0 0.0
    %202 = vmatprep.subr.mxu0 0.0
    %203 = vmatpush1.msra.mxu0 0.0
    %204 = vmatprep.subr.mxu0 0.0
    %205 = vmatpush1.msra.mxu0 0.0
    %206 = vmatprep.subr.mxu0 0.0
    %207 = vmatpush1.msra.mxu0 0.0
    %208 = vmatprep.subr.mxu0 0.0
    %209 = vmatpush1.msra.mxu0 0.0
    %210 = vmatprep.subr.mxu0 0.0
    %211 = vmatpush1.msra.mxu0 0.0
    %212 = vmatprep.subr.mxu0 0.0
    %213 = vmatpush1.msra.mxu0 0.0
    %214 = vmatprep.subr.mxu0 0.0
    %215 = vmatpush1.msra.mxu0 0.0
    %216 = vmatprep.subr.mxu0 0.0
    %217 = vmatpush1.msra.mxu0 0.0
    %218 = vmatprep.subr.mxu0 0.0
    %219 = vmatpush1.msra.mxu0 0.0
    %220 = vmatprep.subr.mxu0 0.0
    %221 = vmatpush1.msra.mxu0 0.0
    %222 = vmatprep.mubr.f32.mxu0 0.0
    %223 = vmatmul.mubr.f32.gmra.mrb[0].mxu0 %v153
    %v224 = vpop.f32.mrb[0].mxu0
    %v225 = vadd.f32 %v143, %v224
    %v226 = vpop.f32.mrb[0].mxu0
    %227 = vmatprep.mubr.f32.mxu0 0.0
    %228 = vmatmul.mubr.f32.gmra.mrb[0].mxu0 %v156
    %v229 = vpop.f32.mrb[0].mxu0
    %v230 = vadd.f32 %v148, %v229
    %v231 = vpop.f32.mrb[0].mxu0
    %232 = vdwg.mxu0
    %233 = vst [vmem:[#allocation5] sm:$0xff] %v225
    %234 = vst [vmem:[#allocation5 + $0x8] sm:$0xff] %v230
    // Predicated region
    $region18: #{tpu_custom_call.1} parent=1 // pred_check
      _
    $region19: #{tpu_custom_call.1} parent=1 // pred_check_branch
      %236 = sbr.rel (0) target = $region21
    $region20: #{tpu_custom_call.1} parent=1 // pred_region
      %s238 = ssub.s32 256, 256
      %239 = vsyncadd [#allocation4], %s238
      %s240 = sshll.u32 [#allocation5], 4
      %s241 = int_to_ptr.vmem [resolvable:$true] %s240
      %246 = dma.vmem_to_hbm [thread:$0]  %s241, 256, %s3, [#allocation4], 128, 128, 8
    $region21: #{tpu_custom_call.1} parent=1 // pred_fallthru
      _
    // Predicated region
    $region22: #{tpu_custom_call.1} parent=1 // pred_check
      _
    $region23: #{tpu_custom_call.1} parent=1 // pred_check_branch
      %248 = sbr.rel (0) target = $region25
    $region24: #{tpu_custom_call.1} parent=1 // pred_region
      %249 = dma.done [#allocation4], 256
    $region25: #{tpu_custom_call.1} parent=1 // pred_fallthru
      _
    %250 = vsyncpa [#allocation3], 1
    %251 = vsyncpa [#allocation4], 1

</llo_original>
